<compile_context>
chip_gen: v5e
topology: v5e:2x2
jax: 0.10.0
libtpu: 0.0.40
codegen_flags: <defaults>
</compile_context>

<pallas_src>
import functools
import math

import jax
import jax.numpy as jnp
from jax.experimental import pallas as pl
from jax.experimental.pallas import tpu as pltpu


def _round_up(x: int, m: int) -> int:
    return (x + m - 1) // m * m


# ---------------------------------------------------------------------------
# Fused single-shot kernel (small graphs): both hops in one VMEM-resident pass.
# ---------------------------------------------------------------------------
def _fused_encoder_kernel(feat_ref, adj_ref, w1_ref, w2_ref, out_ref):
    a = adj_ref[...]                                              # bf16, reused twice
    xw1 = jnp.dot(feat_ref[...], w1_ref[...], preferred_element_type=jnp.float32)
    x1 = jnp.dot(a, xw1.astype(a.dtype), preferred_element_type=jnp.float32)
    x1 = jnp.maximum(x1, 0.0)                                     # VPU slot, free
    xw2 = jnp.dot(x1.astype(w2_ref.dtype), w2_ref[...],
                  preferred_element_type=jnp.float32)
    out_ref[...] = jnp.dot(a, xw2.astype(a.dtype),
                           preferred_element_type=jnp.float32).astype(out_ref.dtype)


def _encoder_fused(feat, adj, w1, w2, *, compute_dtype):
    n, in_feat = feat.shape
    hidden, out_feat = w1.shape[1], w2.shape[1]
    cd = compute_dtype
    in_p, h_p, out_p = (_round_up(d, 128) for d in (in_feat, hidden, out_feat))
    n_p = _round_up(n, 128)

    # Tiny shapes: pad feature dims (lane-dense) and N to 128; cost negligible.
    feat_p = jnp.zeros((n_p, in_p), cd).at[:n, :in_feat].set(feat.astype(cd))
    adj_p = jnp.zeros((n_p, n_p), cd).at[:n, :n].set(adj.astype(cd))
    w1_p = jnp.zeros((in_p, h_p), cd).at[:in_feat, :hidden].set(w1.astype(cd))
    w2_p = jnp.zeros((h_p, out_p), cd).at[:hidden, :out_feat].set(w2.astype(cd))

    itemsize = jnp.dtype(cd).itemsize
    footprint = (n_p * n_p * itemsize + n_p * in_p * itemsize
                 + in_p * h_p * itemsize + h_p * out_p * itemsize
                 + n_p * out_p * 4
                 + 3 * n_p * max(h_p, out_p) * 4)        # f32 intermediates
    vmem_limit = int(min(max(2 * footprint + (16 << 20), 32 << 20), 48 << 20))

    out = pl.pallas_call(
        _fused_encoder_kernel,
        out_shape=jax.ShapeDtypeStruct((n_p, out_p), jnp.float32),
        in_specs=[pl.BlockSpec(memory_space=pltpu.MemorySpace.VMEM)] * 4,
        out_specs=pl.BlockSpec(memory_space=pltpu.MemorySpace.VMEM),
        compiler_params=pltpu.CompilerParams(vmem_limit_bytes=vmem_limit),
    )(feat_p, adj_p, w1_p, w2_p)
    return out[:n, :out_feat]


# ---------------------------------------------------------------------------
# Tiled path (larger graphs):
#   xw = x @ W   (tiny projection kernel, row-tiled, W VMEM-resident)
#   y  = act(adj @ xw)   (adj streamed in full-width row slabs, xw resident)
# ---------------------------------------------------------------------------
def _project_kernel(x_ref, w_ref, out_ref):
    out_ref[...] = jnp.dot(x_ref[...], w_ref[...],
                           preferred_element_type=jnp.float32).astype(out_ref.dtype)


def _project(x, w, *, tm=512, out_dtype=jnp.bfloat16):
    n, kdim = x.shape
    w_cols = w.shape[1]
    tm = min(tm, n)
    grid = (pl.cdiv(n, tm),)
    return pl.pallas_call(
        _project_kernel,
        out_shape=jax.ShapeDtypeStruct((n, w_cols), out_dtype),
        grid_spec=pltpu.PrefetchScalarGridSpec(
            num_scalar_prefetch=0,
            grid=grid,
            in_specs=[pl.BlockSpec((tm, kdim), lambda i: (i, 0)),
                      pl.BlockSpec((kdim, w_cols), lambda i: (0, 0))],  # resident W
            out_specs=pl.BlockSpec((tm, w_cols), lambda i: (i, 0)),
        ),
        compiler_params=pltpu.CompilerParams(dimension_semantics=("parallel",)),
    )(x, w)


def _adj_matmul_kernel(adj_ref, xw_ref, out_ref, *, apply_relu):
    a = adj_ref[...]
    if a.dtype != xw_ref.dtype:
        a = a.astype(xw_ref.dtype)        # per-tile cast; hidden under the DMA wait
    r = jnp.dot(a, xw_ref[...], preferred_element_type=jnp.float32)
    if apply_relu:
        r = jnp.maximum(r, 0.0)
    out_ref[...] = r.astype(out_ref.dtype)


def _adj_matmul(adj_p, xw, *, tm, apply_relu, out_dtype):
    n_p = adj_p.shape[0]
    w_cols = xw.shape[1]
    adj_item = jnp.dtype(adj_p.dtype).itemsize
    xw_item = jnp.dtype(xw.dtype).itemsize
    out_item = jnp.dtype(out_dtype).itemsize

    tm = min(tm, n_p)
    # >= 2 row tiles so the "parallel" axis can load-balance v7x's two TCs.
    while tm > 128 and pl.cdiv(n_p, tm) < 2:
        tm //= 2

    # Fit double-buffered adj row slab + resident xw + out tiles; cap for v7x.
    def _need(t):
        return (2 * t * n_p * adj_item + 2 * n_p * w_cols * xw_item
                + 2 * t * w_cols * out_item)
    while tm > 64 and _need(tm) > (40 << 20):
        tm //= 2
    # TODO(synk): for graphs where n_p * w_cols (xw) itself exceeds VMEM a
    # k-gridded accumulator / block-sparse variant is required.
    vmem_limit = int(min(max(_need(tm) + (16 << 20), 32 << 20), 48 << 20))

    grid = (pl.cdiv(n_p, tm),)
    cost = pl.CostEstimate(
        flops=2 * n_p * n_p * w_cols,
        bytes_accessed=(n_p * n_p * adj_item
                        + n_p * w_cols * (xw_item + out_item)),
        transcendentals=0,
    )
    kernel = functools.partial(_adj_matmul_kernel, apply_relu=apply_relu)
    return pl.pallas_call(
        kernel,
        out_shape=jax.ShapeDtypeStruct((n_p, w_cols), out_dtype),
        grid_spec=pltpu.PrefetchScalarGridSpec(
            num_scalar_prefetch=0,
            grid=grid,
            in_specs=[
                pl.BlockSpec((tm, n_p), lambda i: (i, 0)),       # adj row slab
                pl.BlockSpec((n_p, w_cols), lambda i: (0, 0)),   # xw: VMEM-resident
            ],
            out_specs=pl.BlockSpec((tm, w_cols), lambda i: (i, 0)),
        ),
        compiler_params=pltpu.CompilerParams(
            dimension_semantics=("parallel",),
            vmem_limit_bytes=vmem_limit,
        ),
        cost_estimate=cost,
    )(adj_p, xw)


def _encoder_tiled(feat, adj, w1, w2, *, compute_dtype, tm=256):
    n, in_feat = feat.shape
    hidden, out_feat = w1.shape[1], w2.shape[1]
    cd = compute_dtype
    in_p, h_p, out_p = (_round_up(d, 128) for d in (in_feat, hidden, out_feat))
    n_p = _round_up(n, 128)

    feat_p = jnp.zeros((n_p, in_p), cd).at[:n, :in_feat].set(feat.astype(cd))
    w1_p = jnp.zeros((in_p, h_p), cd).at[:in_feat, :hidden].set(w1.astype(cd))
    w2_p = jnp.zeros((h_p, out_p), cd).at[:hidden, :out_feat].set(w2.astype(cd))

    if n == n_p and adj.dtype in (jnp.dtype(jnp.float32), jnp.dtype(cd)):
        adj_p = adj   # stream as-is: no padded-copy HBM pass before the kernel
    else:
        # TODO(synk): replace this pad/copy with masked ragged last tiles.
        adj_p = jnp.zeros((n_p, n_p), cd).at[:n, :n].set(adj.astype(cd))

    # Stage A: X1 = relu(adj @ (feat @ W1))
    xw1 = _project(feat_p, w1_p, out_dtype=cd)
    x1 = _adj_matmul(adj_p, xw1, tm=tm, apply_relu=True, out_dtype=cd)
    # Stage B: out = adj @ (X1 @ W2)
    xw2 = _project(x1, w2_p, out_dtype=cd)
    out = _adj_matmul(adj_p, xw2, tm=tm, apply_relu=False, out_dtype=jnp.float32)
    return out[:n, :out_feat]


# ---------------------------------------------------------------------------
# Public entry point.
# ---------------------------------------------------------------------------
@functools.partial(jax.jit, static_argnames=("path",))
def encoder_forward(feat, adj, w1, w2, path=None):
    """GCN-style encoder forward; returns f32 [N, out_feat]."""
    n = feat.shape[0]
    hidden, out_feat = w1.shape[1], w2.shape[1]
    cd = jnp.bfloat16
    n_p = _round_up(n, 128)
    h_p, out_p = _round_up(hidden, 128), _round_up(out_feat, 128)
    fused_footprint = n_p * n_p * 2 + n_p * (h_p + out_p) * 6 + (2 << 20)
    use_fused = fused_footprint <= (16 << 20)
    if path == "fused" or (path is None and use_fused):
        return _encoder_fused(feat, adj, w1, w2, compute_dtype=cd)
    return _encoder_tiled(feat, adj, w1, w2, compute_dtype=cd)


# ---------------------------------------------------------------------------
# References / init helpers / self-test.
# ---------------------------------------------------------------------------
def xavier_uniform(key, fan_in, fan_out, dtype=jnp.float32):
    bound = math.sqrt(6.0 / (fan_in + fan_out))
    return jax.random.uniform(key, (fan_in, fan_out), dtype=dtype,
                              minval=-bound, maxval=bound)


def reference_forward_f32(feat, adj, w1, w2):
    x = feat @ w1
    x = adj @ x
    x = jnp.maximum(x, 0.0)
    x = x @ w2
    x = adj @ x
    return x


def reference_forward_bf16(feat, adj, w1, w2):
    """Reference with the same bf16 rounding points as the kernels."""
    cd = jnp.bfloat16
    f, a = feat.astype(cd), adj.astype(cd)
    v1, v2 = w1.astype(cd), w2.astype(cd)
    t1 = jnp.dot(f, v1, preferred_element_type=jnp.float32).astype(cd)
    x = jnp.dot(a, t1, preferred_element_type=jnp.float32)
    x = jnp.maximum(x, 0.0).astype(cd)
    t2 = jnp.dot(x, v2, preferred_element_type=jnp.float32).astype(cd)
    return jnp.dot(a, t2, preferred_element_type=jnp.float32)


def _check(out, feat, adj, w1, w2):
    ref_cast = reference_forward_bf16(feat, adj, w1, w2)
    ref_f32 = reference_forward_f32(feat, adj, w1, w2)
    err = float(jnp.max(jnp.abs(out - ref_cast)))
    assert jnp.allclose(out, ref_cast, atol=1e-2, rtol=1e-2), (
        f"mismatch vs bf16-matched reference (max abs err {err})")
    assert jnp.allclose(out, ref_f32, atol=5e-2, rtol=5e-2), (
        "mismatch vs f32 reference")


if __name__ == "__main__":
    N, IN_FEAT, HIDDEN_FEAT, OUT_FEAT = 200, 30, 64, 20

    key = jax.random.PRNGKey(0)
    k_feat, k_adj, k_w1, k_w2, k_feat2, k_adj2 = jax.random.split(key, 6)

    def make_adj(k, n):
        a = jax.random.uniform(k, (n, n), dtype=jnp.float32)
        a = (a > 0.5).astype(jnp.float32)
        a = jnp.maximum(a, a.T) + jnp.eye(n, dtype=jnp.float32)
        return a / jnp.sum(a, axis=1, keepdims=True)

    feat = jax.random.normal(k_feat, (N, IN_FEAT), dtype=jnp.float32)
    adj = make_adj(k_adj, N)
    w1 = xavier_uniform(k_w1, IN_FEAT, HIDDEN_FEAT)
    w2 = xavier_uniform(k_w2, HIDDEN_FEAT, OUT_FEAT)

    # Path 1: fused single-shot VMEM kernel (auto-selected for this small graph).
    out = jax.block_until_ready(encoder_forward(feat, adj, w1, w2))
    assert out.shape == (N, OUT_FEAT)
    _check(out, feat, adj, w1, w2)

    # Path 2: tiled path (hoisted projection + VMEM-resident xw + streamed adj
    # row slabs), exercised on a 128-aligned graph so adj needs no padded copy.
    N2 = 512
    feat2 = jax.random.normal(k_feat2, (N2, IN_FEAT), dtype=jnp.float32)
    adj2 = make_adj(k_adj2, N2)
    out2 = jax.block_until_ready(
        encoder_forward(feat2, adj2, w1, w2, path="tiled"))
    assert out2.shape == (N2, OUT_FEAT)
    _check(out2, feat2, adj2, w1, w2)

    print("KERNEL_OK")
</pallas_src>

<mosaic_0001>
module attributes {stable_mosaic.version = 11 : i64} {
  func.func @_fused_encoder_kernel(%arg0: memref<256x128xbf16, #tpu.memory_space<vmem>>, %arg1: memref<256x256xbf16, #tpu.memory_space<vmem>>, %arg2: memref<128x128xbf16, #tpu.memory_space<vmem>>, %arg3: memref<128x128xbf16, #tpu.memory_space<vmem>>, %arg4: memref<256x128xf32, #tpu.memory_space<vmem>>) attributes {dimension_semantics = [], scalar_prefetch = 0 : i64, scratch_operands = 0 : i64, tpu.core_type = #tpu.core_type<tc>} {
    %c0 = arith.constant 0 : index
    %c0_0 = arith.constant 0 : index
    %0 = vector.load %arg1[%c0, %c0_0] : memref<256x256xbf16, #tpu.memory_space<vmem>>, vector<256x256xbf16>
    %c0_1 = arith.constant 0 : index
    %c0_2 = arith.constant 0 : index
    %1 = vector.load %arg0[%c0_1, %c0_2] : memref<256x128xbf16, #tpu.memory_space<vmem>>, vector<256x128xbf16>
    %c0_3 = arith.constant 0 : index
    %c0_4 = arith.constant 0 : index
    %2 = vector.load %arg2[%c0_3, %c0_4] : memref<128x128xbf16, #tpu.memory_space<vmem>>, vector<128x128xbf16>
    %cst = arith.constant dense<0.000000e+00> : vector<256x128xf32>
    %3 = tpu.matmul %1, %2, %cst {dimension_numbers = #tpu.dot_dimension_numbers<[1], [0], [0], [1], [0, 0, 1, 1], [], []>} : vector<256x128xbf16>, vector<128x128xbf16>, vector<256x128xf32> -> vector<256x128xf32>
    %4 = arith.truncf %3 : vector<256x128xf32> to vector<256x128xbf16>
    %cst_5 = arith.constant dense<0.000000e+00> : vector<256x128xf32>
    %5 = tpu.matmul %0, %4, %cst_5 {dimension_numbers = #tpu.dot_dimension_numbers<[1], [0], [0], [1], [0, 0, 1, 1], [], []>} : vector<256x256xbf16>, vector<256x128xbf16>, vector<256x128xf32> -> vector<256x128xf32>
    %cst_6 = arith.constant 0.000000e+00 : f32
    %6 = vector.broadcast %cst_6 : f32 to vector<256x128xf32>
    %7 = arith.maximumf %5, %6 : vector<256x128xf32>
    %8 = arith.truncf %7 : vector<256x128xf32> to vector<256x128xbf16>
    %c0_7 = arith.constant 0 : index
    %c0_8 = arith.constant 0 : index
    %9 = vector.load %arg3[%c0_7, %c0_8] : memref<128x128xbf16, #tpu.memory_space<vmem>>, vector<128x128xbf16>
    %cst_9 = arith.constant dense<0.000000e+00> : vector<256x128xf32>
    %10 = tpu.matmul %8, %9, %cst_9 {dimension_numbers = #tpu.dot_dimension_numbers<[1], [0], [0], [1], [0, 0, 1, 1], [], []>} : vector<256x128xbf16>, vector<128x128xbf16>, vector<256x128xf32> -> vector<256x128xf32>
    %11 = arith.truncf %10 : vector<256x128xf32> to vector<256x128xbf16>
    %cst_10 = arith.constant dense<0.000000e+00> : vector<256x128xf32>
    %12 = tpu.matmul %0, %11, %cst_10 {dimension_numbers = #tpu.dot_dimension_numbers<[1], [0], [0], [1], [0, 0, 1, 1], [], []>} : vector<256x256xbf16>, vector<256x128xbf16>, vector<256x128xf32> -> vector<256x128xf32>
    %c0_11 = arith.constant 0 : index
    %c0_12 = arith.constant 0 : index
    %13 = vector.load %arg4[%c0_11, %c0_12] : memref<256x128xf32, #tpu.memory_space<vmem>>, vector<256x128xf32>
    tpu.vector_store %arg4[%c0_11, %c0_12], %12 {strides = array<i32>} : memref<256x128xf32, #tpu.memory_space<vmem>>, vector<256x128xf32>,
    return
  }
}

</mosaic_0001>

<llo_original>
// kernel: encoder_forward.1
$region0: #{encoder_forward.1}
  #allocation0 [shape = 'u32[]', space=smem, size = 0x4, offset = 0x4, fixed_abs, tag = 'smem constant byte address 0x4 - core index']
  #allocation1 [shape = 'u32[72,128]{1,0:T(1,128)}', space=vmem, size = 0x9000, scoped, tag = 'internal scratch']
  %s0 = inlined_call_operand.vmem [shape: bf16[256,128], index: 0, kind: input, shape index: {}]
  %s1 = inlined_call_operand.vmem [shape: bf16[256,256], index: 1, kind: input, shape index: {}]
  %s2 = inlined_call_operand.vmem [shape: bf16[128,128], index: 2, kind: input, shape index: {}]
  %s3 = inlined_call_operand.vmem [shape: bf16[128,128], index: 3, kind: input, shape index: {}]
  %s4 = inlined_call_operand.vmem [shape: f32[256,128], index: 4, kind: output, shape index: {}]
  %s5 = sld [smem:[#allocation0]]
  $region26: #{encoder_forward.1} parent=0
    _
  %s7 = ssub.s32 1, %s5
  %s8 = scalar_select 0, %s7, %s5
  // Predicated region
  $region2: #{encoder_forward.1} parent=0 // pred_check
    _
  $region3: #{encoder_forward.1} parent=0 // pred_check_branch
    %10 = sbr.rel (0) target = $region5
  $region4: #{encoder_forward.1} parent=0 // pred_region
    _
  $region5: #{encoder_forward.1} parent=0 // pred_fallthru
    _
  // Predicated region
  $region6: #{encoder_forward.1} parent=0 // pred_check
    _
  $region7: #{encoder_forward.1} parent=0 // pred_check_branch
    %12 = sbr.rel (0) target = $region9
  $region8: #{encoder_forward.1} parent=0 // pred_region
    _
  $region9: #{encoder_forward.1} parent=0 // pred_fallthru
    _
  // Predicated region
  $region10: #{encoder_forward.1} parent=0 // pred_check
    _
  $region11: #{encoder_forward.1} parent=0 // pred_check_branch
    %14 = sbr.rel (0) target = $region13
  $region12: #{encoder_forward.1} parent=0 // pred_region
    _
  $region13: #{encoder_forward.1} parent=0 // pred_fallthru
    _
  // Predicated region
  $region14: #{encoder_forward.1} parent=0 // pred_check
    _
  $region15: #{encoder_forward.1} parent=0 // pred_check_branch
    %16 = sbr.rel (0) target = $region17
  $region16: #{encoder_forward.1} parent=0 // pred_region
    _
  $region17: #{encoder_forward.1} parent=0 // pred_fallthru
    _
  %v17 = vld [vmem:[%s1] sm:$0xff]
  %v18 = vld [vmem:[%s1 + $0x8] sm:$0xff]
  %v19 = vld [vmem:[%s1 + $0x10] sm:$0xff]
  %v20 = vld [vmem:[%s1 + $0x18] sm:$0xff]
  %v21 = vld [vmem:[%s1 + $0x20] sm:$0xff]
  %v22 = vld [vmem:[%s1 + $0x28] sm:$0xff]
  %v23 = vld [vmem:[%s1 + $0x30] sm:$0xff]
  %v24 = vld [vmem:[%s1 + $0x38] sm:$0xff]
  %v25 = vld [vmem:[%s1 + $0x40] sm:$0xff]
  %v26 = vld [vmem:[%s1 + $0x48] sm:$0xff]
  %v27 = vld [vmem:[%s1 + $0x50] sm:$0xff]
  %v28 = vld [vmem:[%s1 + $0x58] sm:$0xff]
  %v29 = vld [vmem:[%s1 + $0x60] sm:$0xff]
  %v30 = vld [vmem:[%s1 + $0x68] sm:$0xff]
  %v31 = vld [vmem:[%s1 + $0x70] sm:$0xff]
  %v32 = vld [vmem:[%s1 + $0x78] sm:$0xff]
  %v33 = vld [vmem:[%s1 + $0x80] sm:$0xff]
  %v34 = vld [vmem:[%s1 + $0x88] sm:$0xff]
  %v35 = vld [vmem:[%s1 + $0x90] sm:$0xff]
  %v36 = vld [vmem:[%s1 + $0x98] sm:$0xff]
  %v37 = vld [vmem:[%s1 + $0xa0] sm:$0xff]
  %v38 = vld [vmem:[%s1 + $0xa8] sm:$0xff]
  %v39 = vld [vmem:[%s1 + $0xb0] sm:$0xff]
  %v40 = vld [vmem:[%s1 + $0xb8] sm:$0xff]
  %v41 = vld [vmem:[%s1 + $0xc0] sm:$0xff]
  %v42 = vld [vmem:[%s1 + $0xc8] sm:$0xff]
  %v43 = vld [vmem:[%s1 + $0xd0] sm:$0xff]
  %v44 = vld [vmem:[%s1 + $0xd8] sm:$0xff]
  %v45 = vld [vmem:[%s1 + $0xe0] sm:$0xff]
  %v46 = vld [vmem:[%s1 + $0xe8] sm:$0xff]
  %v47 = vld [vmem:[%s1 + $0xf0] sm:$0xff]
  %v48 = vld [vmem:[%s1 + $0xf8] sm:$0xff]
  %v49 = vld [vmem:[%s0] sm:$0xf]
  %v50 = vld [vmem:[%s0 + $0x4] sm:$0xf]
  %v51 = vld [vmem:[%s0 + $0x8] sm:$0xf]
  %v52 = vld [vmem:[%s0 + $0xc] sm:$0xf]
  %v53 = vld [vmem:[%s0 + $0x10] sm:$0xf]
  %v54 = vld [vmem:[%s0 + $0x14] sm:$0xf]
  %v55 = vld [vmem:[%s0 + $0x18] sm:$0xf]
  %v56 = vld [vmem:[%s0 + $0x1c] sm:$0xf]
  %v57 = vld [vmem:[%s0 + $0x20] sm:$0xf]
  %v58 = vld [vmem:[%s0 + $0x24] sm:$0xf]
  %v59 = vld [vmem:[%s0 + $0x28] sm:$0xf]
  %v60 = vld [vmem:[%s0 + $0x2c] sm:$0xf]
  %v61 = vld [vmem:[%s0 + $0x30] sm:$0xf]
  %v62 = vld [vmem:[%s0 + $0x34] sm:$0xf]
  %v63 = vld [vmem:[%s0 + $0x38] sm:$0xf]
  %v64 = vld [vmem:[%s0 + $0x3c] sm:$0xf]
  %v65 = vld [vmem:[%s0 + $0x40] sm:$0xf]
  %v66 = vld [vmem:[%s0 + $0x44] sm:$0xf]
  %v67 = vld [vmem:[%s0 + $0x48] sm:$0xf]
  %v68 = vld [vmem:[%s0 + $0x4c] sm:$0xf]
  %v69 = vld [vmem:[%s0 + $0x50] sm:$0xf]
  %v70 = vld [vmem:[%s0 + $0x54] sm:$0xf]
  %v71 = vld [vmem:[%s0 + $0x58] sm:$0xf]
  %v72 = vld [vmem:[%s0 + $0x5c] sm:$0xf]
  %v73 = vld [vmem:[%s0 + $0x60] sm:$0xf]
  %v74 = vld [vmem:[%s0 + $0x64] sm:$0xf]
  %v75 = vld [vmem:[%s0 + $0x68] sm:$0xf]
  %v76 = vld [vmem:[%s0 + $0x6c] sm:$0xf]
  %v77 = vld [vmem:[%s0 + $0x70] sm:$0xf]
  %v78 = vld [vmem:[%s0 + $0x74] sm:$0xf]
  %v79 = vld [vmem:[%s0 + $0x78] sm:$0xf]
  %v80 = vld [vmem:[%s0 + $0x7c] sm:$0xf]
  %v81 = vld [vmem:[%s2] sm:$0xf]
  %v82 = vld [vmem:[%s2 + $0x4] sm:$0xf]
  %v83 = vld [vmem:[%s2 + $0x8] sm:$0xf]
  %v84 = vld [vmem:[%s2 + $0xc] sm:$0xf]
  %v85 = vld [vmem:[%s2 + $0x10] sm:$0xf]
  %v86 = vld [vmem:[%s2 + $0x14] sm:$0xf]
  %v87 = vld [vmem:[%s2 + $0x18] sm:$0xf]
  %v88 = vld [vmem:[%s2 + $0x1c] sm:$0xf]
  %v89 = vld [vmem:[%s2 + $0x20] sm:$0xf]
  %v90 = vld [vmem:[%s2 + $0x24] sm:$0xf]
  %v91 = vld [vmem:[%s2 + $0x28] sm:$0xf]
  %v92 = vld [vmem:[%s2 + $0x2c] sm:$0xf]
  %v93 = vld [vmem:[%s2 + $0x30] sm:$0xf]
  %v94 = vld [vmem:[%s2 + $0x34] sm:$0xf]
  %v95 = vld [vmem:[%s2 + $0x38] sm:$0xf]
  %v96 = vld [vmem:[%s2 + $0x3c] sm:$0xf]
  %v129 = vunpack.c.l.b16 %v49
  %v130 = vunpack.c.l.b16 %v50
  %v131 = vunpack.c.l.b16 %v51
  %v132 = vunpack.c.l.b16 %v52
  %v133 = vunpack.c.l.b16 %v53
  %v134 = vunpack.c.l.b16 %v54
  %v135 = vunpack.c.l.b16 %v55
  %v136 = vunpack.c.l.b16 %v56
  %v137 = vunpack.c.l.b16 %v57
  %v138 = vunpack.c.l.b16 %v58
  %v139 = vunpack.c.l.b16 %v59
  %v140 = vunpack.c.l.b16 %v60
  %v141 = vunpack.c.l.b16 %v61
  %v142 = vunpack.c.l.b16 %v62
  %v143 = vunpack.c.l.b16 %v63
  %v144 = vunpack.c.l.b16 %v64
  %v145 = vunpack.c.l.b16 %v65
  %v146 = vunpack.c.l.b16 %v66
  %v147 = vunpack.c.l.b16 %v67
  %v148 = vunpack.c.l.b16 %v68
  %v149 = vunpack.c.l.b16 %v69
  %v150 = vunpack.c.l.b16 %v70
  %v151 = vunpack.c.l.b16 %v71
  %v152 = vunpack.c.l.b16 %v72
  %v153 = vunpack.c.l.b16 %v73
  %v154 = vunpack.c.l.b16 %v74
  %v155 = vunpack.c.l.b16 %v75
  %v156 = vunpack.c.l.b16 %v76
  %v157 = vunpack.c.l.b16 %v77
  %v158 = vunpack.c.l.b16 %v78
  %v159 = vunpack.c.l.b16 %v79
  %v160 = vunpack.c.l.b16 %v80
  %v161 = vpack.c.b16 %v130, %v129
  %v162 = vpack.c.b16 %v132, %v131
  %v163 = vpack.c.b16 %v134, %v133
  %v164 = vpack.c.b16 %v136, %v135
  %v165 = vpack.c.b16 %v138, %v137
  %v166 = vpack.c.b16 %v140, %v139
  %v167 = vpack.c.b16 %v142, %v141
  %v168 = vpack.c.b16 %v144, %v143
  %v169 = vpack.c.b16 %v146, %v145
  %v170 = vpack.c.b16 %v148, %v147
  %v171 = vpack.c.b16 %v150, %v149
  %v172 = vpack.c.b16 %v152, %v151
  %v173 = vpack.c.b16 %v154, %v153
  %v174 = vpack.c.b16 %v156, %v155
  %v175 = vpack.c.b16 %v158, %v157
  %v176 = vpack.c.b16 %v160, %v159
  %v209 = vunpack.c.l.b16 %v81
  %v210 = vunpack.c.l.b16 %v82
  %v211 = vunpack.c.l.b16 %v83
  %v212 = vunpack.c.l.b16 %v84
  %v213 = vunpack.c.l.b16 %v85
  %v214 = vunpack.c.l.b16 %v86
  %v215 = vunpack.c.l.b16 %v87
  %v216 = vunpack.c.l.b16 %v88
  %v217 = vunpack.c.l.b16 %v89
  %v218 = vunpack.c.l.b16 %v90
  %v219 = vunpack.c.l.b16 %v91
  %v220 = vunpack.c.l.b16 %v92
  %v221 = vunpack.c.l.b16 %v93
  %v222 = vunpack.c.l.b16 %v94
  %v223 = vunpack.c.l.b16 %v95
  %v224 = vunpack.c.l.b16 %v96
  %v225 = vpack.c.b16 %v210, %v209
  %v226 = vpack.c.b16 %v212, %v211
  %v227 = vpack.c.b16 %v214, %v213
  %v228 = vpack.c.b16 %v216, %v215
  %v229 = vpack.c.b16 %v218, %v217
  %v230 = vpack.c.b16 %v220, %v219
  %v231 = vpack.c.b16 %v222, %v221
  %v232 = vpack.c.b16 %v224, %v223
  %241 = vmatpush.bf16.msra.mxu0 %v232
  %242 = vmatpush.bf16.msra.mxu0 %v231
  %243 = vmatpush.bf16.msra.mxu0 %v230
  %244 = vmatpush.bf16.msra.mxu0 %v229
  %245 = vmatpush.bf16.msra.mxu0 %v228
  %246 = vmatpush.bf16.msra.mxu0 %v227
  %247 = vmatpush.bf16.msra.mxu0 %v226
  %248 = vmatpush.bf16.msra.mxu0 %v225
  %249 = vmatmul.bf16.gmra.mxu0 %v161
  %v250 = vpop.f32.mrf.mxu0
  %v251 = vadd.f32 0.0, %v250
  %v252 = vpop.f32.mrf.mxu0
  %v253 = vadd.f32 0.0, %v252
  %254 = vmatmul.bf16.gmra.mxu0 %v162
  %v255 = vpop.f32.mrf.mxu0
  %v256 = vadd.f32 0.0, %v255
  %v257 = vpop.f32.mrf.mxu0
  %v258 = vadd.f32 0.0, %v257
  %259 = vmatmul.bf16.gmra.mxu0 %v163
  %v260 = vpop.f32.mrf.mxu0
  %v261 = vadd.f32 0.0, %v260
  %v262 = vpop.f32.mrf.mxu0
  %v263 = vadd.f32 0.0, %v262
  %264 = vmatmul.bf16.gmra.mxu0 %v164
  %v265 = vpop.f32.mrf.mxu0
  %v266 = vadd.f32 0.0, %v265
  %v267 = vpop.f32.mrf.mxu0
  %v268 = vadd.f32 0.0, %v267
  %269 = vmatmul.bf16.gmra.mxu0 %v165
  %v270 = vpop.f32.mrf.mxu0
  %v271 = vadd.f32 0.0, %v270
  %v272 = vpop.f32.mrf.mxu0
  %v273 = vadd.f32 0.0, %v272
  %274 = vmatmul.bf16.gmra.mxu0 %v166
  %v275 = vpop.f32.mrf.mxu0
  %v276 = vadd.f32 0.0, %v275
  %v277 = vpop.f32.mrf.mxu0
  %v278 = vadd.f32 0.0, %v277
  %279 = vmatmul.bf16.gmra.mxu0 %v167
  %v280 = vpop.f32.mrf.mxu0
  %v281 = vadd.f32 0.0, %v280
  %v282 = vpop.f32.mrf.mxu0
  %v283 = vadd.f32 0.0, %v282
  %284 = vmatmul.bf16.gmra.mxu0 %v168
  %v285 = vpop.f32.mrf.mxu0
  %v286 = vadd.f32 0.0, %v285
  %v287 = vpop.f32.mrf.mxu0
  %v288 = vadd.f32 0.0, %v287
  %289 = vmatmul.bf16.gmra.mxu0 %v169
  %v290 = vpop.f32.mrf.mxu0
  %v291 = vadd.f32 0.0, %v290
  %v292 = vpop.f32.mrf.mxu0
  %v293 = vadd.f32 0.0, %v292
  %294 = vmatmul.bf16.gmra.mxu0 %v170
  %v295 = vpop.f32.mrf.mxu0
  %v296 = vadd.f32 0.0, %v295
  %v297 = vpop.f32.mrf.mxu0
  %v298 = vadd.f32 0.0, %v297
  %299 = vmatmul.bf16.gmra.mxu0 %v171
  %v300 = vpop.f32.mrf.mxu0
  %v301 = vadd.f32 0.0, %v300
  %v302 = vpop.f32.mrf.mxu0
  %v303 = vadd.f32 0.0, %v302
  %304 = vmatmul.bf16.gmra.mxu0 %v172
  %v305 = vpop.f32.mrf.mxu0
  %v306 = vadd.f32 0.0, %v305
  %v307 = vpop.f32.mrf.mxu0
  %v308 = vadd.f32 0.0, %v307
  %309 = vmatmul.bf16.gmra.mxu0 %v173
  %v310 = vpop.f32.mrf.mxu0
  %v311 = vadd.f32 0.0, %v310
  %v312 = vpop.f32.mrf.mxu0
  %v313 = vadd.f32 0.0, %v312
  %314 = vmatmul.bf16.gmra.mxu0 %v174
  %v315 = vpop.f32.mrf.mxu0
  %v316 = vadd.f32 0.0, %v315
  %v317 = vpop.f32.mrf.mxu0
  %v318 = vadd.f32 0.0, %v317
  %319 = vmatmul.bf16.gmra.mxu0 %v175
  %v320 = vpop.f32.mrf.mxu0
  %v321 = vadd.f32 0.0, %v320
  %v322 = vpop.f32.mrf.mxu0
  %v323 = vadd.f32 0.0, %v322
  %324 = vmatmul.bf16.gmra.mxu0 %v176
  %v325 = vpop.f32.mrf.mxu0
  %v326 = vadd.f32 0.0, %v325
  %v327 = vpop.f32.mrf.mxu0
  %v328 = vadd.f32 0.0, %v327
  %329 = vdwg.mxu0
  %v330 = vpack.c.bf16 %v253, %v251
  %v331 = vpack.c.bf16 %v258, %v256
  %v332 = vpack.c.bf16 %v263, %v261
  %v333 = vpack.c.bf16 %v268, %v266
  %v334 = vpack.c.bf16 %v273, %v271
  %v335 = vpack.c.bf16 %v278, %v276
  %v336 = vpack.c.bf16 %v283, %v281
  %v337 = vpack.c.bf16 %v288, %v286
  %v338 = vpack.c.bf16 %v293, %v291
  %v339 = vpack.c.bf16 %v298, %v296
  %v340 = vpack.c.bf16 %v303, %v301
  %v341 = vpack.c.bf16 %v308, %v306
  %v342 = vpack.c.bf16 %v313, %v311
  %v343 = vpack.c.bf16 %v318, %v316
  %v344 = vpack.c.bf16 %v323, %v321
  %v345 = vpack.c.bf16 %v328, %v326
  %v378 = vunpack.c.l.b16 %v17
  %v379 = vunpack.c.h.b16 %v17
  %v380 = vunpack.c.l.b16 %v18
  %v381 = vunpack.c.h.b16 %v18
  %v382 = vunpack.c.l.b16 %v19
  %v383 = vunpack.c.h.b16 %v19
  %v384 = vunpack.c.l.b16 %v20
  %v385 = vunpack.c.h.b16 %v20
  %v386 = vunpack.c.l.b16 %v21
  %v387 = vunpack.c.h.b16 %v21
  %v388 = vunpack.c.l.b16 %v22
  %v389 = vunpack.c.h.b16 %v22
  %v390 = vunpack.c.l.b16 %v23
  %v391 = vunpack.c.h.b16 %v23
  %v392 = vunpack.c.l.b16 %v24
  %v393 = vunpack.c.h.b16 %v24
  %v394 = vunpack.c.l.b16 %v25
  %v395 = vunpack.c.h.b16 %v25
  %v396 = vunpack.c.l.b16 %v26
  %v397 = vunpack.c.h.b16 %v26
  %v398 = vunpack.c.l.b16 %v27
  %v399 = vunpack.c.h.b16 %v27
  %v400 = vunpack.c.l.b16 %v28
  %v401 = vunpack.c.h.b16 %v28
  %v402 = vunpack.c.l.b16 %v29
  %v403 = vunpack.c.h.b16 %v29
  %v404 = vunpack.c.l.b16 %v30
  %v405 = vunpack.c.h.b16 %v30
  %v406 = vunpack.c.l.b16 %v31
  %v407 = vunpack.c.h.b16 %v31
  %v408 = vunpack.c.l.b16 %v32
  %v409 = vunpack.c.h.b16 %v32
  %v410 = vunpack.c.l.b16 %v33
  %v411 = vunpack.c.h.b16 %v33
  %v412 = vunpack.c.l.b16 %v34
  %v413 = vunpack.c.h.b16 %v34
  %v414 = vunpack.c.l.b16 %v35
  %v415 = vunpack.c.h.b16 %v35
  %v416 = vunpack.c.l.b16 %v36
  %v417 = vunpack.c.h.b16 %v36
  %v418 = vunpack.c.l.b16 %v37
  %v419 = vunpack.c.h.b16 %v37
  %v420 = vunpack.c.l.b16 %v38
  %v421 = vunpack.c.h.b16 %v38
  %v422 = vunpack.c.l.b16 %v39
  %v423 = vunpack.c.h.b16 %v39
  %v424 = vunpack.c.l.b16 %v40
  %v425 = vunpack.c.h.b16 %v40
  %v426 = vunpack.c.l.b16 %v41
  %v427 = vunpack.c.h.b16 %v41
  %v428 = vunpack.c.l.b16 %v42
  %v429 = vunpack.c.h.b16 %v42
  %v430 = vunpack.c.l.b16 %v43
  %v431 = vunpack.c.h.b16 %v43
  %v432 = vunpack.c.l.b16 %v44
  %v433 = vunpack.c.h.b16 %v44
  %v434 = vunpack.c.l.b16 %v45
  %v435 = vunpack.c.h.b16 %v45
  %v436 = vunpack.c.l.b16 %v46
  %v437 = vunpack.c.h.b16 %v46
  %v438 = vunpack.c.l.b16 %v47
  %v439 = vunpack.c.h.b16 %v47
  %v440 = vunpack.c.l.b16 %v48
  %v441 = vunpack.c.h.b16 %v48
  %v442 = vpack.c.b16 %v380, %v378
  %v443 = vpack.c.b16 %v381, %v379
  %v444 = vpack.c.b16 %v384, %v382
  %v445 = vpack.c.b16 %v385, %v383
  %v446 = vpack.c.b16 %v388, %v386
  %v447 = vpack.c.b16 %v389, %v387
  %v448 = vpack.c.b16 %v392, %v390
  %v449 = vpack.c.b16 %v393, %v391
  %v450 = vpack.c.b16 %v396, %v394
  %v451 = vpack.c.b16 %v397, %v395
  %v452 = vpack.c.b16 %v400, %v398
  %v453 = vpack.c.b16 %v401, %v399
  %v454 = vpack.c.b16 %v404, %v402
  %v455 = vpack.c.b16 %v405, %v403
  %v456 = vpack.c.b16 %v408, %v406
  %v457 = vpack.c.b16 %v409, %v407
  %v458 = vpack.c.b16 %v412, %v410
  %v459 = vpack.c.b16 %v413, %v411
  %v460 = vpack.c.b16 %v416, %v414
  %v461 = vpack.c.b16 %v417, %v415
  %v462 = vpack.c.b16 %v420, %v418
  %v463 = vpack.c.b16 %v421, %v419
  %v464 = vpack.c.b16 %v424, %v422
  %v465 = vpack.c.b16 %v425, %v423
  %v466 = vpack.c.b16 %v428, %v426
  %v467 = vpack.c.b16 %v429, %v427
  %v468 = vpack.c.b16 %v432, %v430
  %v469 = vpack.c.b16 %v433, %v431
  %v470 = vpack.c.b16 %v436, %v434
  %v471 = vpack.c.b16 %v437, %v435
  %v472 = vpack.c.b16 %v440, %v438
  %v473 = vpack.c.b16 %v441, %v439
  %506 = vmatpush.bf16.msra.mxu0 %v337
  %507 = vmatpush.bf16.msra.mxu0 %v336
  %508 = vmatpush.bf16.msra.mxu0 %v335
  %509 = vmatpush.bf16.msra.mxu0 %v334
  %510 = vmatpush.bf16.msra.mxu0 %v333
  %511 = vmatpush.bf16.msra.mxu0 %v332
  %512 = vmatpush.bf16.msra.mxu0 %v331
  %513 = vmatpush.bf16.msra.mxu0 %v330
  %514 = vmatmul.bf16.gmra.mxu0 %v442
  %v515 = vpop.f32.mrf.mxu0
  %v516 = vadd.f32 0.0, %v515
  %v517 = vpop.f32.mrf.mxu0
  %v518 = vadd.f32 0.0, %v517
  %519 = vmatmul.bf16.gmra.mxu0 %v444
  %v520 = vpop.f32.mrf.mxu0
  %v521 = vadd.f32 0.0, %v520
  %v522 = vpop.f32.mrf.mxu0
  %v523 = vadd.f32 0.0, %v522
  %524 = vmatmul.bf16.gmra.mxu0 %v446
  %v525 = vpop.f32.mrf.mxu0
  %v526 = vadd.f32 0.0, %v525
  %v527 = vpop.f32.mrf.mxu0
  %v528 = vadd.f32 0.0, %v527
  %529 = vmatmul.bf16.gmra.mxu0 %v448
  %v530 = vpop.f32.mrf.mxu0
  %v531 = vadd.f32 0.0, %v530
  %v532 = vpop.f32.mrf.mxu0
  %v533 = vadd.f32 0.0, %v532
  %534 = vmatmul.bf16.gmra.mxu0 %v450
  %v535 = vpop.f32.mrf.mxu0
  %v536 = vadd.f32 0.0, %v535
  %v537 = vpop.f32.mrf.mxu0
  %v538 = vadd.f32 0.0, %v537
  %539 = vmatmul.bf16.gmra.mxu0 %v452
  %v540 = vpop.f32.mrf.mxu0
  %v541 = vadd.f32 0.0, %v540
  %v542 = vpop.f32.mrf.mxu0
  %v543 = vadd.f32 0.0, %v542
  %544 = vmatmul.bf16.gmra.mxu0 %v454
  %v545 = vpop.f32.mrf.mxu0
  %v546 = vadd.f32 0.0, %v545
  %v547 = vpop.f32.mrf.mxu0
  %v548 = vadd.f32 0.0, %v547
  %549 = vmatmul.bf16.gmra.mxu0 %v456
  %v550 = vpop.f32.mrf.mxu0
  %v551 = vadd.f32 0.0, %v550
  %v552 = vpop.f32.mrf.mxu0
  %v553 = vadd.f32 0.0, %v552
  %554 = vmatmul.bf16.gmra.mxu0 %v458
  %v555 = vpop.f32.mrf.mxu0
  %v556 = vadd.f32 0.0, %v555
  %v557 = vpop.f32.mrf.mxu0
  %v558 = vadd.f32 0.0, %v557
  %559 = vmatmul.bf16.gmra.mxu0 %v460
  %v560 = vpop.f32.mrf.mxu0
  %v561 = vadd.f32 0.0, %v560
  %v562 = vpop.f32.mrf.mxu0
  %v563 = vadd.f32 0.0, %v562
  %564 = vmatmul.bf16.gmra.mxu0 %v462
  %v565 = vpop.f32.mrf.mxu0
  %v566 = vadd.f32 0.0, %v565
  %v567 = vpop.f32.mrf.mxu0
  %v568 = vadd.f32 0.0, %v567
  %569 = vmatmul.bf16.gmra.mxu0 %v464
  %v570 = vpop.f32.mrf.mxu0
  %v571 = vadd.f32 0.0, %v570
  %v572 = vpop.f32.mrf.mxu0
  %v573 = vadd.f32 0.0, %v572
  %574 = vmatmul.bf16.gmra.mxu0 %v466
  %v575 = vpop.f32.mrf.mxu0
  %v576 = vadd.f32 0.0, %v575
  %v577 = vpop.f32.mrf.mxu0
  %v578 = vadd.f32 0.0, %v577
  %579 = vmatmul.bf16.gmra.mxu0 %v468
  %v580 = vpop.f32.mrf.mxu0
  %v581 = vadd.f32 0.0, %v580
  %v582 = vpop.f32.mrf.mxu0
  %v583 = vadd.f32 0.0, %v582
  %584 = vmatmul.bf16.gmra.mxu0 %v470
  %v585 = vpop.f32.mrf.mxu0
  %v586 = vadd.f32 0.0, %v585
  %v587 = vpop.f32.mrf.mxu0
  %v588 = vadd.f32 0.0, %v587
  %589 = vmatmul.bf16.gmra.mxu0 %v472
  %v590 = vpop.f32.mrf.mxu0
  %v591 = vadd.f32 0.0, %v590
  %v592 = vpop.f32.mrf.mxu0
  %v593 = vadd.f32 0.0, %v592
  %594 = vdwg.mxu0
  %595 = vmatpush.bf16.msra.mxu0 %v345
  %596 = vmatpush.bf16.msra.mxu0 %v344
  %597 = vmatpush.bf16.msra.mxu0 %v343
  %598 = vmatpush.bf16.msra.mxu0 %v342
  %599 = vmatpush.bf16.msra.mxu0 %v341
  %600 = vmatpush.bf16.msra.mxu0 %v340
  %601 = vmatpush.bf16.msra.mxu0 %v339
  %602 = vmatpush.bf16.msra.mxu0 %v338
  %603 = vmatmul.bf16.gmra.mxu0 %v443
  %v604 = vpop.f32.mrf.mxu0
  %v605 = vadd.f32 %v516, %v604
  %v606 = vpop.f32.mrf.mxu0
  %v607 = vadd.f32 %v518, %v606
  %608 = vmatmul.bf16.gmra.mxu0 %v445
  %v609 = vpop.f32.mrf.mxu0
  %v610 = vadd.f32 %v521, %v609
  %v611 = vpop.f32.mrf.mxu0
  %v612 = vadd.f32 %v523, %v611
  %613 = vmatmul.bf16.gmra.mxu0 %v447
  %v614 = vpop.f32.mrf.mxu0
  %v615 = vadd.f32 %v526, %v614
  %v616 = vpop.f32.mrf.mxu0
  %v617 = vadd.f32 %v528, %v616
  %618 = vmatmul.bf16.gmra.mxu0 %v449
  %v619 = vpop.f32.mrf.mxu0
  %v620 = vadd.f32 %v531, %v619
  %v621 = vpop.f32.mrf.mxu0
  %v622 = vadd.f32 %v533, %v621
  %623 = vmatmul.bf16.gmra.mxu0 %v451
  %v624 = vpop.f32.mrf.mxu0
  %v625 = vadd.f32 %v536, %v624
  %v626 = vpop.f32.mrf.mxu0
  %v627 = vadd.f32 %v538, %v626
  %628 = vmatmul.bf16.gmra.mxu0 %v453
  %v629 = vpop.f32.mrf.mxu0
  %v630 = vadd.f32 %v541, %v629
  %v631 = vpop.f32.mrf.mxu0
  %v632 = vadd.f32 %v543, %v631
  %633 = vmatmul.bf16.gmra.mxu0 %v455
  %v634 = vpop.f32.mrf.mxu0
  %v635 = vadd.f32 %v546, %v634
  %v636 = vpop.f32.mrf.mxu0
  %v637 = vadd.f32 %v548, %v636
  %638 = vmatmul.bf16.gmra.mxu0 %v457
  %v639 = vpop.f32.mrf.mxu0
  %v640 = vadd.f32 %v551, %v639
  %v641 = vpop.f32.mrf.mxu0
  %v642 = vadd.f32 %v553, %v641
  %643 = vmatmul.bf16.gmra.mxu0 %v459
  %v644 = vpop.f32.mrf.mxu0
  %v645 = vadd.f32 %v556, %v644
  %v646 = vpop.f32.mrf.mxu0
  %v647 = vadd.f32 %v558, %v646
  %648 = vmatmul.bf16.gmra.mxu0 %v461
  %v649 = vpop.f32.mrf.mxu0
  %v650 = vadd.f32 %v561, %v649
  %v651 = vpop.f32.mrf.mxu0
  %v652 = vadd.f32 %v563, %v651
  %653 = vmatmul.bf16.gmra.mxu0 %v463
  %v654 = vpop.f32.mrf.mxu0
  %v655 = vadd.f32 %v566, %v654
  %v656 = vpop.f32.mrf.mxu0
  %v657 = vadd.f32 %v568, %v656
  %658 = vmatmul.bf16.gmra.mxu0 %v465
  %v659 = vpop.f32.mrf.mxu0
  %v660 = vadd.f32 %v571, %v659
  %v661 = vpop.f32.mrf.mxu0
  %v662 = vadd.f32 %v573, %v661
  %663 = vmatmul.bf16.gmra.mxu0 %v467
  %v664 = vpop.f32.mrf.mxu0
  %v665 = vadd.f32 %v576, %v664
  %v666 = vpop.f32.mrf.mxu0
  %v667 = vadd.f32 %v578, %v666
  %668 = vmatmul.bf16.gmra.mxu0 %v469
  %v669 = vpop.f32.mrf.mxu0
  %v670 = vadd.f32 %v581, %v669
  %v671 = vpop.f32.mrf.mxu0
  %v672 = vadd.f32 %v583, %v671
  %673 = vmatmul.bf16.gmra.mxu0 %v471
  %v674 = vpop.f32.mrf.mxu0
  %v675 = vadd.f32 %v586, %v674
  %v676 = vpop.f32.mrf.mxu0
  %v677 = vadd.f32 %v588, %v676
  %678 = vmatmul.bf16.gmra.mxu0 %v473
  %v679 = vpop.f32.mrf.mxu0
  %v680 = vadd.f32 %v591, %v679
  %v681 = vpop.f32.mrf.mxu0
  %v682 = vadd.f32 %v593, %v681
  %683 = vdwg.mxu0
  %v684 = vmax.f32 %v605, 0.0
  %v685 = vmax.f32 %v607, 0.0
  %v686 = vmax.f32 %v610, 0.0
  %v687 = vmax.f32 %v612, 0.0
  %v688 = vmax.f32 %v615, 0.0
  %v689 = vmax.f32 %v617, 0.0
  %v690 = vmax.f32 %v620, 0.0
  %v691 = vmax.f32 %v622, 0.0
  %v692 = vmax.f32 %v625, 0.0
  %v693 = vmax.f32 %v627, 0.0
  %v694 = vmax.f32 %v630, 0.0
  %v695 = vmax.f32 %v632, 0.0
  %v696 = vmax.f32 %v635, 0.0
  %v697 = vmax.f32 %v637, 0.0
  %v698 = vmax.f32 %v640, 0.0
  %v699 = vmax.f32 %v642, 0.0
  %v700 = vmax.f32 %v645, 0.0
  %v701 = vmax.f32 %v647, 0.0
  %v702 = vmax.f32 %v650, 0.0
  %v703 = vmax.f32 %v652, 0.0
  %v704 = vmax.f32 %v655, 0.0
  %v705 = vmax.f32 %v657, 0.0
  %v706 = vmax.f32 %v660, 0.0
  %v707 = vmax.f32 %v662, 0.0
  %v708 = vmax.f32 %v665, 0.0
  %v709 = vmax.f32 %v667, 0.0
  %v710 = vmax.f32 %v670, 0.0
  %v711 = vmax.f32 %v672, 0.0
  %v712 = vmax.f32 %v675, 0.0
  %v713 = vmax.f32 %v677, 0.0
  %v714 = vmax.f32 %v680, 0.0
  %v715 = vmax.f32 %v682, 0.0
  %v716 = vpack.c.bf16 %v685, %v684
  %v717 = vpack.c.bf16 %v687, %v686
  %v718 = vpack.c.bf16 %v689, %v688
  %v719 = vpack.c.bf16 %v691, %v690
  %v720 = vpack.c.bf16 %v693, %v692
  %v721 = vpack.c.bf16 %v695, %v694
  %v722 = vpack.c.bf16 %v697, %v696
  %v723 = vpack.c.bf16 %v699, %v698
  %v724 = vpack.c.bf16 %v701, %v700
  %v725 = vpack.c.bf16 %v703, %v702
  %v726 = vpack.c.bf16 %v705, %v704
  %v727 = vpack.c.bf16 %v707, %v706
  %v728 = vpack.c.bf16 %v709, %v708
  %v729 = vpack.c.bf16 %v711, %v710
  %v730 = vpack.c.bf16 %v713, %v712
  %v731 = vpack.c.bf16 %v715, %v714
  %v732 = vld [vmem:[%s3] sm:$0xf]
  %v733 = vld [vmem:[%s3 + $0x4] sm:$0xf]
  %v734 = vld [vmem:[%s3 + $0x8] sm:$0xf]
  %v735 = vld [vmem:[%s3 + $0xc] sm:$0xf]
  %v736 = vld [vmem:[%s3 + $0x10] sm:$0xf]
  %v737 = vld [vmem:[%s3 + $0x14] sm:$0xf]
  %v738 = vld [vmem:[%s3 + $0x18] sm:$0xf]
  %v739 = vld [vmem:[%s3 + $0x1c] sm:$0xf]
  %v740 = vld [vmem:[%s3 + $0x20] sm:$0xf]
  %v741 = vld [vmem:[%s3 + $0x24] sm:$0xf]
  %v742 = vld [vmem:[%s3 + $0x28] sm:$0xf]
  %v743 = vld [vmem:[%s3 + $0x2c] sm:$0xf]
  %v744 = vld [vmem:[%s3 + $0x30] sm:$0xf]
  %v745 = vld [vmem:[%s3 + $0x34] sm:$0xf]
  %v746 = vld [vmem:[%s3 + $0x38] sm:$0xf]
  %v747 = vld [vmem:[%s3 + $0x3c] sm:$0xf]
  %v764 = vunpack.c.l.b16 %v732
  %v765 = vunpack.c.l.b16 %v733
  %v766 = vunpack.c.l.b16 %v734
  %v767 = vunpack.c.l.b16 %v735
  %v768 = vunpack.c.l.b16 %v736
  %v769 = vunpack.c.l.b16 %v737
  %v770 = vunpack.c.l.b16 %v738
  %v771 = vunpack.c.l.b16 %v739
  %v772 = vunpack.c.l.b16 %v740
  %v773 = vunpack.c.l.b16 %v741
  %v774 = vunpack.c.l.b16 %v742
  %v775 = vunpack.c.l.b16 %v743
  %v776 = vunpack.c.l.b16 %v744
  %v777 = vunpack.c.l.b16 %v745
  %v778 = vunpack.c.l.b16 %v746
  %v779 = vunpack.c.l.b16 %v747
  %v780 = vpack.c.b16 %v765, %v764
  %v781 = vpack.c.b16 %v767, %v766
  %v782 = vpack.c.b16 %v769, %v768
  %v783 = vpack.c.b16 %v771, %v770
  %v784 = vpack.c.b16 %v773, %v772
  %v785 = vpack.c.b16 %v775, %v774
  %v786 = vpack.c.b16 %v777, %v776
  %v787 = vpack.c.b16 %v779, %v778
  %796 = vmatpush.bf16.msra.mxu0 %v787
  %797 = vmatpush.bf16.msra.mxu0 %v786
  %798 = vmatpush.bf16.msra.mxu0 %v785
  %799 = vmatpush.bf16.msra.mxu0 %v784
  %800 = vmatpush.bf16.msra.mxu0 %v783
  %801 = vmatpush.bf16.msra.mxu0 %v782
  %802 = vmatpush.bf16.msra.mxu0 %v781
  %803 = vmatpush.bf16.msra.mxu0 %v780
  %804 = vmatmul.bf16.gmra.mxu0 %v716
  %v805 = vpop.f32.mrf.mxu0
  %v806 = vadd.f32 0.0, %v805
  %v807 = vpop.f32.mrf.mxu0
  %v808 = vadd.f32 0.0, %v807
  %809 = vmatmul.bf16.gmra.mxu0 %v717
  %v810 = vpop.f32.mrf.mxu0
  %v811 = vadd.f32 0.0, %v810
  %v812 = vpop.f32.mrf.mxu0
  %v813 = vadd.f32 0.0, %v812
  %814 = vmatmul.bf16.gmra.mxu0 %v718
  %v815 = vpop.f32.mrf.mxu0
  %v816 = vadd.f32 0.0, %v815
  %v817 = vpop.f32.mrf.mxu0
  %v818 = vadd.f32 0.0, %v817
  %819 = vmatmul.bf16.gmra.mxu0 %v719
  %v820 = vpop.f32.mrf.mxu0
  %v821 = vadd.f32 0.0, %v820
  %v822 = vpop.f32.mrf.mxu0
  %v823 = vadd.f32 0.0, %v822
  %824 = vmatmul.bf16.gmra.mxu0 %v720
  %v825 = vpop.f32.mrf.mxu0
  %v826 = vadd.f32 0.0, %v825
  %v827 = vpop.f32.mrf.mxu0
  %v828 = vadd.f32 0.0, %v827
  %829 = vmatmul.bf16.gmra.mxu0 %v721
  %v830 = vpop.f32.mrf.mxu0
  %v831 = vadd.f32 0.0, %v830
  %v832 = vpop.f32.mrf.mxu0
  %v833 = vadd.f32 0.0, %v832
  %834 = vmatmul.bf16.gmra.mxu0 %v722
  %v835 = vpop.f32.mrf.mxu0
  %v836 = vadd.f32 0.0, %v835
  %v837 = vpop.f32.mrf.mxu0
  %v838 = vadd.f32 0.0, %v837
  %839 = vmatmul.bf16.gmra.mxu0 %v723
  %v840 = vpop.f32.mrf.mxu0
  %v841 = vadd.f32 0.0, %v840
  %v842 = vpop.f32.mrf.mxu0
  %v843 = vadd.f32 0.0, %v842
  %844 = vmatmul.bf16.gmra.mxu0 %v724
  %v845 = vpop.f32.mrf.mxu0
  %v846 = vadd.f32 0.0, %v845
  %v847 = vpop.f32.mrf.mxu0
  %v848 = vadd.f32 0.0, %v847
  %849 = vmatmul.bf16.gmra.mxu0 %v725
  %v850 = vpop.f32.mrf.mxu0
  %v851 = vadd.f32 0.0, %v850
  %v852 = vpop.f32.mrf.mxu0
  %v853 = vadd.f32 0.0, %v852
  %854 = vmatmul.bf16.gmra.mxu0 %v726
  %v855 = vpop.f32.mrf.mxu0
  %v856 = vadd.f32 0.0, %v855
  %v857 = vpop.f32.mrf.mxu0
  %v858 = vadd.f32 0.0, %v857
  %859 = vmatmul.bf16.gmra.mxu0 %v727
  %v860 = vpop.f32.mrf.mxu0
  %v861 = vadd.f32 0.0, %v860
  %v862 = vpop.f32.mrf.mxu0
  %v863 = vadd.f32 0.0, %v862
  %864 = vmatmul.bf16.gmra.mxu0 %v728
  %v865 = vpop.f32.mrf.mxu0
  %v866 = vadd.f32 0.0, %v865
  %v867 = vpop.f32.mrf.mxu0
  %v868 = vadd.f32 0.0, %v867
  %869 = vmatmul.bf16.gmra.mxu0 %v729
  %v870 = vpop.f32.mrf.mxu0
  %v871 = vadd.f32 0.0, %v870
  %v872 = vpop.f32.mrf.mxu0
  %v873 = vadd.f32 0.0, %v872
  %874 = vmatmul.bf16.gmra.mxu0 %v730
  %v875 = vpop.f32.mrf.mxu0
  %v876 = vadd.f32 0.0, %v875
  %v877 = vpop.f32.mrf.mxu0
  %v878 = vadd.f32 0.0, %v877
  %879 = vmatmul.bf16.gmra.mxu0 %v731
  %v880 = vpop.f32.mrf.mxu0
  %v881 = vadd.f32 0.0, %v880
  %v882 = vpop.f32.mrf.mxu0
  %v883 = vadd.f32 0.0, %v882
  %884 = vdwg.mxu0
  %v885 = vpack.c.bf16 %v808, %v806
  %v886 = vpack.c.bf16 %v813, %v811
  %v887 = vpack.c.bf16 %v818, %v816
  %v888 = vpack.c.bf16 %v823, %v821
  %v889 = vpack.c.bf16 %v828, %v826
  %v890 = vpack.c.bf16 %v833, %v831
  %v891 = vpack.c.bf16 %v838, %v836
  %v892 = vpack.c.bf16 %v843, %v841
  %v893 = vpack.c.bf16 %v848, %v846
  %v894 = vpack.c.bf16 %v853, %v851
  %v895 = vpack.c.bf16 %v858, %v856
  %v896 = vpack.c.bf16 %v863, %v861
  %v897 = vpack.c.bf16 %v868, %v866
  %v898 = vpack.c.bf16 %v873, %v871
  %v899 = vpack.c.bf16 %v878, %v876
  %v900 = vpack.c.bf16 %v883, %v881
  %901 = vmatpush.bf16.msra.mxu0 %v892
  %902 = vmatpush.bf16.msra.mxu0 %v891
  %903 = vmatpush.bf16.msra.mxu0 %v890
  %904 = vmatpush.bf16.msra.mxu0 %v889
  %905 = vmatpush.bf16.msra.mxu0 %v888
  %906 = vmatpush.bf16.msra.mxu0 %v887
  %907 = vmatpush.bf16.msra.mxu0 %v886
  %908 = vmatpush.bf16.msra.mxu0 %v885
  %909 = vmatmul.bf16.gmra.mxu0 %v442
  %v910 = vpop.f32.mrf.mxu0
  %v911 = vadd.f32 0.0, %v910
  %v912 = vpop.f32.mrf.mxu0
  %v913 = vadd.f32 0.0, %v912
  %914 = vmatmul.bf16.gmra.mxu0 %v444
  %v915 = vpop.f32.mrf.mxu0
  %v916 = vadd.f32 0.0, %v915
  %v917 = vpop.f32.mrf.mxu0
  %v918 = vadd.f32 0.0, %v917
  %919 = vmatmul.bf16.gmra.mxu0 %v446
  %v920 = vpop.f32.mrf.mxu0
  %v921 = vadd.f32 0.0, %v920
  %v922 = vpop.f32.mrf.mxu0
  %v923 = vadd.f32 0.0, %v922
  %924 = vmatmul.bf16.gmra.mxu0 %v448
  %v925 = vpop.f32.mrf.mxu0
  %v926 = vadd.f32 0.0, %v925
  %v927 = vpop.f32.mrf.mxu0
  %v928 = vadd.f32 0.0, %v927
  %929 = vmatmul.bf16.gmra.mxu0 %v450
  %v930 = vpop.f32.mrf.mxu0
  %v931 = vadd.f32 0.0, %v930
  %v932 = vpop.f32.mrf.mxu0
  %v933 = vadd.f32 0.0, %v932
  %934 = vmatmul.bf16.gmra.mxu0 %v452
  %v935 = vpop.f32.mrf.mxu0
  %v936 = vadd.f32 0.0, %v935
  %v937 = vpop.f32.mrf.mxu0
  %v938 = vadd.f32 0.0, %v937
  %939 = vmatmul.bf16.gmra.mxu0 %v454
  %v940 = vpop.f32.mrf.mxu0
  %v941 = vadd.f32 0.0, %v940
  %v942 = vpop.f32.mrf.mxu0
  %v943 = vadd.f32 0.0, %v942
  %944 = vmatmul.bf16.gmra.mxu0 %v456
  %v945 = vpop.f32.mrf.mxu0
  %v946 = vadd.f32 0.0, %v945
  %v947 = vpop.f32.mrf.mxu0
  %v948 = vadd.f32 0.0, %v947
  %949 = vmatmul.bf16.gmra.mxu0 %v458
  %v950 = vpop.f32.mrf.mxu0
  %v951 = vadd.f32 0.0, %v950
  %v952 = vpop.f32.mrf.mxu0
  %v953 = vadd.f32 0.0, %v952
  %954 = vmatmul.bf16.gmra.mxu0 %v460
  %v955 = vpop.f32.mrf.mxu0
  %v956 = vadd.f32 0.0, %v955
  %v957 = vpop.f32.mrf.mxu0
  %v958 = vadd.f32 0.0, %v957
  %959 = vmatmul.bf16.gmra.mxu0 %v462
  %v960 = vpop.f32.mrf.mxu0
  %v961 = vadd.f32 0.0, %v960
  %v962 = vpop.f32.mrf.mxu0
  %v963 = vadd.f32 0.0, %v962
  %964 = vmatmul.bf16.gmra.mxu0 %v464
  %v965 = vpop.f32.mrf.mxu0
  %v966 = vadd.f32 0.0, %v965
  %v967 = vpop.f32.mrf.mxu0
  %v968 = vadd.f32 0.0, %v967
  %969 = vmatmul.bf16.gmra.mxu0 %v466
  %v970 = vpop.f32.mrf.mxu0
  %v971 = vadd.f32 0.0, %v970
  %v972 = vpop.f32.mrf.mxu0
  %v973 = vadd.f32 0.0, %v972
  %974 = vmatmul.bf16.gmra.mxu0 %v468
  %v975 = vpop.f32.mrf.mxu0
  %v976 = vadd.f32 0.0, %v975
  %v977 = vpop.f32.mrf.mxu0
  %v978 = vadd.f32 0.0, %v977
  %979 = vmatmul.bf16.gmra.mxu0 %v470
  %v980 = vpop.f32.mrf.mxu0
  %v981 = vadd.f32 0.0, %v980
  %v982 = vpop.f32.mrf.mxu0
  %v983 = vadd.f32 0.0, %v982
  %984 = vmatmul.bf16.gmra.mxu0 %v472
  %v985 = vpop.f32.mrf.mxu0
  %v986 = vadd.f32 0.0, %v985
  %v987 = vpop.f32.mrf.mxu0
  %v988 = vadd.f32 0.0, %v987
  %989 = vdwg.mxu0
  %990 = vmatpush.bf16.msra.mxu0 %v900
  %991 = vmatpush.bf16.msra.mxu0 %v899
  %992 = vmatpush.bf16.msra.mxu0 %v898
  %993 = vmatpush.bf16.msra.mxu0 %v897
  %994 = vmatpush.bf16.msra.mxu0 %v896
  %995 = vmatpush.bf16.msra.mxu0 %v895
  %996 = vmatpush.bf16.msra.mxu0 %v894
  %997 = vmatpush.bf16.msra.mxu0 %v893
  %998 = vmatmul.bf16.gmra.mxu0 %v443
  %v999 = vpop.f32.mrf.mxu0
  %v1000 = vadd.f32 %v911, %v999
  %v1001 = vpop.f32.mrf.mxu0
  %v1002 = vadd.f32 %v913, %v1001
  %1003 = vmatmul.bf16.gmra.mxu0 %v445
  %v1004 = vpop.f32.mrf.mxu0
  %v1005 = vadd.f32 %v916, %v1004
  %v1006 = vpop.f32.mrf.mxu0
  %v1007 = vadd.f32 %v918, %v1006
  %1008 = vmatmul.bf16.gmra.mxu0 %v447
  %v1009 = vpop.f32.mrf.mxu0
  %v1010 = vadd.f32 %v921, %v1009
  %v1011 = vpop.f32.mrf.mxu0
  %v1012 = vadd.f32 %v923, %v1011
  %1013 = vmatmul.bf16.gmra.mxu0 %v449
  %v1014 = vpop.f32.mrf.mxu0
  %v1015 = vadd.f32 %v926, %v1014
  %v1016 = vpop.f32.mrf.mxu0
  %v1017 = vadd.f32 %v928, %v1016
  %1018 = vmatmul.bf16.gmra.mxu0 %v451
  %v1019 = vpop.f32.mrf.mxu0
  %v1020 = vadd.f32 %v931, %v1019
  %v1021 = vpop.f32.mrf.mxu0
  %v1022 = vadd.f32 %v933, %v1021
  %1023 = vmatmul.bf16.gmra.mxu0 %v453
  %v1024 = vpop.f32.mrf.mxu0
  %v1025 = vadd.f32 %v936, %v1024
  %v1026 = vpop.f32.mrf.mxu0
  %v1027 = vadd.f32 %v938, %v1026
  %1028 = vmatmul.bf16.gmra.mxu0 %v455
  %v1029 = vpop.f32.mrf.mxu0
  %v1030 = vadd.f32 %v941, %v1029
  %v1031 = vpop.f32.mrf.mxu0
  %v1032 = vadd.f32 %v943, %v1031
  %1033 = vmatmul.bf16.gmra.mxu0 %v457
  %v1034 = vpop.f32.mrf.mxu0
  %v1035 = vadd.f32 %v946, %v1034
  %v1036 = vpop.f32.mrf.mxu0
  %v1037 = vadd.f32 %v948, %v1036
  %1038 = vmatmul.bf16.gmra.mxu0 %v459
  %v1039 = vpop.f32.mrf.mxu0
  %v1040 = vadd.f32 %v951, %v1039
  %v1041 = vpop.f32.mrf.mxu0
  %v1042 = vadd.f32 %v953, %v1041
  %1043 = vmatmul.bf16.gmra.mxu0 %v461
  %v1044 = vpop.f32.mrf.mxu0
  %v1045 = vadd.f32 %v956, %v1044
  %v1046 = vpop.f32.mrf.mxu0
  %v1047 = vadd.f32 %v958, %v1046
  %1048 = vmatmul.bf16.gmra.mxu0 %v463
  %v1049 = vpop.f32.mrf.mxu0
  %v1050 = vadd.f32 %v961, %v1049
  %v1051 = vpop.f32.mrf.mxu0
  %v1052 = vadd.f32 %v963, %v1051
  %1053 = vmatmul.bf16.gmra.mxu0 %v465
  %v1054 = vpop.f32.mrf.mxu0
  %v1055 = vadd.f32 %v966, %v1054
  %v1056 = vpop.f32.mrf.mxu0
  %v1057 = vadd.f32 %v968, %v1056
  %1058 = vmatmul.bf16.gmra.mxu0 %v467
  %v1059 = vpop.f32.mrf.mxu0
  %v1060 = vadd.f32 %v971, %v1059
  %v1061 = vpop.f32.mrf.mxu0
  %v1062 = vadd.f32 %v973, %v1061
  %1063 = vmatmul.bf16.gmra.mxu0 %v469
  %v1064 = vpop.f32.mrf.mxu0
  %v1065 = vadd.f32 %v976, %v1064
  %v1066 = vpop.f32.mrf.mxu0
  %v1067 = vadd.f32 %v978, %v1066
  %1068 = vmatmul.bf16.gmra.mxu0 %v471
  %v1069 = vpop.f32.mrf.mxu0
  %v1070 = vadd.f32 %v981, %v1069
  %v1071 = vpop.f32.mrf.mxu0
  %v1072 = vadd.f32 %v983, %v1071
  %1073 = vmatmul.bf16.gmra.mxu0 %v473
  %v1074 = vpop.f32.mrf.mxu0
  %v1075 = vadd.f32 %v986, %v1074
  %v1076 = vpop.f32.mrf.mxu0
  %v1077 = vadd.f32 %v988, %v1076
  %1078 = vdwg.mxu0
  %1079 = vst [vmem:[%s4] sm:$0xff] %v1000
  %1080 = vst [vmem:[%s4 + $0x8] sm:$0xff] %v1002
  %1081 = vst [vmem:[%s4 + $0x10] sm:$0xff] %v1005
  %1082 = vst [vmem:[%s4 + $0x18] sm:$0xff] %v1007
  %1083 = vst [vmem:[%s4 + $0x20] sm:$0xff] %v1010
  %1084 = vst [vmem:[%s4 + $0x28] sm:$0xff] %v1012
  %1085 = vst [vmem:[%s4 + $0x30] sm:$0xff] %v1015
  %1086 = vst [vmem:[%s4 + $0x38] sm:$0xff] %v1017
  %1087 = vst [vmem:[%s4 + $0x40] sm:$0xff] %v1020
  %1088 = vst [vmem:[%s4 + $0x48] sm:$0xff] %v1022
  %1089 = vst [vmem:[%s4 + $0x50] sm:$0xff] %v1025
  %1090 = vst [vmem:[%s4 + $0x58] sm:$0xff] %v1027
  %1091 = vst [vmem:[%s4 + $0x60] sm:$0xff] %v1030
  %1092 = vst [vmem:[%s4 + $0x68] sm:$0xff] %v1032
  %1093 = vst [vmem:[%s4 + $0x70] sm:$0xff] %v1035
  %1094 = vst [vmem:[%s4 + $0x78] sm:$0xff] %v1037
  %1095 = vst [vmem:[%s4 + $0x80] sm:$0xff] %v1040
  %1096 = vst [vmem:[%s4 + $0x88] sm:$0xff] %v1042
  %1097 = vst [vmem:[%s4 + $0x90] sm:$0xff] %v1045
  %1098 = vst [vmem:[%s4 + $0x98] sm:$0xff] %v1047
  %1099 = vst [vmem:[%s4 + $0xa0] sm:$0xff] %v1050
  %1100 = vst [vmem:[%s4 + $0xa8] sm:$0xff] %v1052
  %1101 = vst [vmem:[%s4 + $0xb0] sm:$0xff] %v1055
  %1102 = vst [vmem:[%s4 + $0xb8] sm:$0xff] %v1057
  %1103 = vst [vmem:[%s4 + $0xc0] sm:$0xff] %v1060
  %1104 = vst [vmem:[%s4 + $0xc8] sm:$0xff] %v1062
  %1105 = vst [vmem:[%s4 + $0xd0] sm:$0xff] %v1065
  %1106 = vst [vmem:[%s4 + $0xd8] sm:$0xff] %v1067
  %1107 = vst [vmem:[%s4 + $0xe0] sm:$0xff] %v1070
  %1108 = vst [vmem:[%s4 + $0xe8] sm:$0xff] %v1072
  %1109 = vst [vmem:[%s4 + $0xf0] sm:$0xff] %v1075
  %1110 = vst [vmem:[%s4 + $0xf8] sm:$0xff] %v1077
  // Predicated region
  $region18: #{encoder_forward.1} parent=0 // pred_check
    _
  $region19: #{encoder_forward.1} parent=0 // pred_check_branch
    %1112 = sbr.rel (0) target = $region21
  $region20: #{encoder_forward.1} parent=0 // pred_region
    _
  $region21: #{encoder_forward.1} parent=0 // pred_fallthru
    _
  // Predicated region
  $region22: #{encoder_forward.1} parent=0 // pred_check
    _
  $region23: #{encoder_forward.1} parent=0 // pred_check_branch
    %1114 = sbr.rel (0) target = $region25
  $region24: #{encoder_forward.1} parent=0 // pred_region
    _
  $region25: #{encoder_forward.1} parent=0 // pred_fallthru
    _

</llo_original>
